<compile_context>
chip_gen: v5e
topology: v5e:2x2
jax: 0.10.0
libtpu: 0.0.40
codegen_flags: <defaults>
</compile_context>

<pallas_src>
import functools

import jax
import jax.numpy as jnp
from jax.experimental import pallas as pl
from jax.experimental.pallas import tpu as pltpu


def _round_up(n, m):
    return ((n + m - 1) // m) * m


def ann_kernel(x_ref, w1_ref, b1_ref, w2_ref, b2_ref, o_ref):
    # x_ref : (TILE_B, D_in)   VMEM, pipelined over the batch grid
    # w1_ref: (D_in, E_pad)    VMEM, resident
    # b1_ref: (1, E_pad)       VMEM, resident
    # w2_ref: (1, E_pad)       VMEM, resident (fc2 weight as a row)
    # b2_ref: (1, 1)           SMEM scalar
    # o_ref : (1, TILE_B)      lane-dense output slab
    h = jnp.dot(
        x_ref[...],
        w1_ref[...],
        preferred_element_type=jnp.float32,
        precision=jax.lax.Precision.HIGHEST,
    )
    h = jnp.maximum(h + b1_ref[...], 0.0)  # bias + ReLU on the VPU (f32 path)
    # fc2: (TILE_B, E_pad) * (1, E_pad) -> lane reduce; no 1-column MXU pass.
    out = jnp.sum(h * w2_ref[...], axis=-1) + b2_ref[0, 0]  # (TILE_B,)
    o_ref[...] = out[None, :].astype(o_ref.dtype)


@functools.partial(jax.jit, static_argnames=("tile_b",))
def ann_forward(x, w1, b1, w2, b2, *, tile_b=512):
    """x: (B, D_in); w1: (D_in, E); b1: (1, E); w2: (E, 1); b2: (1, 1) -> (B, 1)."""
    B, d_in = x.shape
    E = w1.shape[1]

    # --- pad E (lane dim of fc1 / reduce dim of fc2) to a multiple of 128 ----
    e_pad = _round_up(max(E, 128), 128)
    if e_pad != E:
        w1 = jnp.pad(w1, ((0, 0), (0, e_pad - E)))
        b1 = jnp.pad(b1, ((0, 0), (0, e_pad - E)))
        w2 = jnp.pad(w2, ((0, e_pad - E), (0, 0)))
    w2_row = w2.T  # (1, e_pad)

    # --- choose a batch tile (>=128, lane-dense output) and pad B ------------
    tile_b = max(128, min(_round_up(tile_b, 128), _round_up(B, 128)))
    b_pad = _round_up(B, tile_b)
    if b_pad != B:
        x = jnp.pad(x, ((0, b_pad - B), (0, 0)))

    grid = (b_pad // tile_b,)

    # --- VMEM budget: resident weights + double-buffered x/out + intermediate
    itemsize = 4
    vmem_bytes = (
        2 * tile_b * d_in * itemsize      # x double-buffer
        + d_in * e_pad * itemsize         # resident w1
        + 2 * e_pad * itemsize            # resident b1, w2_row
        + 2 * tile_b * itemsize           # out double-buffer
        + 2 * tile_b * e_pad * itemsize   # intermediate h + headroom
    )
    vmem_limit = int(min(max(2 * vmem_bytes, 4 << 20), 64 << 20))

    cost = pl.CostEstimate(
        flops=2 * b_pad * d_in * e_pad + 2 * b_pad * e_pad,
        transcendentals=0,
        bytes_accessed=(b_pad * d_in + d_in * e_pad + 2 * e_pad + b_pad) * itemsize,
    )

    out = pl.pallas_call(
        ann_kernel,
        out_shape=jax.ShapeDtypeStruct((1, b_pad), jnp.float32),
        grid=grid,
        in_specs=[
            pl.BlockSpec((tile_b, d_in), lambda i: (i, 0)),      # x: tiled over batch
            pl.BlockSpec((d_in, e_pad), lambda i: (0, 0)),       # w1: resident
            pl.BlockSpec((1, e_pad), lambda i: (0, 0)),          # b1: resident
            pl.BlockSpec((1, e_pad), lambda i: (0, 0)),          # w2 row: resident
            pl.BlockSpec(memory_space=pltpu.MemorySpace.SMEM),   # b2: SMEM scalar
        ],
        out_specs=pl.BlockSpec((1, tile_b), lambda i: (0, i)),   # lane-dense slab
        compiler_params=pltpu.CompilerParams(
            dimension_semantics=("parallel",),
            vmem_limit_bytes=vmem_limit,
        ),
        cost_estimate=cost,
    )(x, w1, b1, w2_row, b2)

    return out[0, :B].reshape(B, 1)


def init_params(key, input_size, emb_size):
    """Deterministic init mimicking PyTorch nn.Linear default (uniform +-1/sqrt(fan_in))."""
    k1, k2, k3, k4 = jax.random.split(key, 4)
    bound1 = 1.0 / jnp.sqrt(jnp.float32(input_size))
    bound2 = 1.0 / jnp.sqrt(jnp.float32(emb_size))
    # Stored as (in, out) — i.e. PyTorch weight.T — so kernel computes x @ W.
    w1 = jax.random.uniform(k1, (input_size, emb_size), jnp.float32, -bound1, bound1)
    b1 = jax.random.uniform(k2, (1, emb_size), jnp.float32, -bound1, bound1)
    w2 = jax.random.uniform(k3, (emb_size, 1), jnp.float32, -bound2, bound2)
    b2 = jax.random.uniform(k4, (1, 1), jnp.float32, -bound2, bound2)
    return w1, b1, w2, b2


if __name__ == "__main__":
    input_size = 32
    emb_size = 20
    batch = 8

    key = jax.random.PRNGKey(0)
    kx, kp = jax.random.split(key)
    x = jax.random.normal(kx, (batch, input_size), jnp.float32)
    w1, b1, w2, b2 = init_params(kp, input_size, emb_size)

    out = ann_forward(x, w1, b1, w2, b2)
    jax.block_until_ready(out)

    # Pure-JAX reference of the same forward pass (matching f32 precision).
    h_ref = jnp.maximum(
        jnp.dot(x, w1, precision=jax.lax.Precision.HIGHEST) + b1, 0.0
    )
    ref = jnp.dot(h_ref, w2, precision=jax.lax.Precision.HIGHEST) + b2

    assert out.shape == (batch, 1)
    assert jnp.allclose(out, ref, atol=1e-5, rtol=1e-5)

    print("KERNEL_OK")
</pallas_src>

<mosaic_0001>
module attributes {stable_mosaic.version = 11 : i64} {
  func.func @ann_kernel(%arg0: i32, %arg1: memref<128x32xf32, #tpu.memory_space<vmem>>, %arg2: memref<32x128xf32, #tpu.memory_space<vmem>>, %arg3: memref<1x128xf32, #tpu.memory_space<vmem>>, %arg4: memref<1x128xf32, #tpu.memory_space<vmem>>, %arg5: memref<1x1xf32, #tpu.memory_space<smem>>, %arg6: memref<1x128xf32, #tpu.memory_space<vmem>>) attributes {dimension_semantics = [#tpu.dimension_semantics<parallel>], iteration_bounds = array<i64: 1>, scalar_prefetch = 0 : i64, scratch_operands = 0 : i64, tpu.core_type = #tpu.core_type<tc>, window_params = [{transform_indices = @transform_0, window_bounds = array<i64: 128, 32>}, {pipeline_mode = #tpu.pipeline_mode<synchronous>, transform_indices = @transform_1, window_bounds = array<i64: 32, 128>}, {pipeline_mode = #tpu.pipeline_mode<synchronous>, transform_indices = @transform_2, window_bounds = array<i64: 1, 128>}, {pipeline_mode = #tpu.pipeline_mode<synchronous>, transform_indices = @transform_3, window_bounds = array<i64: 1, 128>}, {transform_indices = @transform_4, window_bounds = array<i64: 1, 1>}, {transform_indices = @transform_5, window_bounds = array<i64: 1, 128>}]} {
    %c0 = arith.constant 0 : index
    %c0_0 = arith.constant 0 : index
    %0 = vector.load %arg1[%c0, %c0_0] : memref<128x32xf32, #tpu.memory_space<vmem>>, vector<128x32xf32>
    %c0_1 = arith.constant 0 : index
    %c0_2 = arith.constant 0 : index
    %1 = vector.load %arg2[%c0_1, %c0_2] : memref<32x128xf32, #tpu.memory_space<vmem>>, vector<32x128xf32>
    %cst = arith.constant dense<0.000000e+00> : vector<128x128xf32>
    %2 = tpu.matmul %0, %1, %cst {dimension_numbers = #tpu.dot_dimension_numbers<[1], [0], [0], [1], [0, 0, 1, 1], [], []>, precision = #tpu.contract_precision<fp32>} : vector<128x32xf32>, vector<32x128xf32>, vector<128x128xf32> -> vector<128x128xf32>
    %c0_3 = arith.constant 0 : index
    %c0_4 = arith.constant 0 : index
    %3 = vector.load %arg3[%c0_3, %c0_4] : memref<1x128xf32, #tpu.memory_space<vmem>>, vector<1x128xf32>
    %4 = vector.broadcast %3 : vector<1x128xf32> to vector<128x128xf32>
    %5 = arith.addf %2, %4 : vector<128x128xf32>
    %cst_5 = arith.constant 0.000000e+00 : f32
    %6 = vector.broadcast %cst_5 : f32 to vector<128x128xf32>
    %7 = arith.maximumf %5, %6 : vector<128x128xf32>
    %c0_6 = arith.constant 0 : index
    %c0_7 = arith.constant 0 : index
    %8 = vector.load %arg4[%c0_6, %c0_7] : memref<1x128xf32, #tpu.memory_space<vmem>>, vector<1x128xf32>
    %9 = vector.broadcast %8 : vector<1x128xf32> to vector<128x128xf32>
    %10 = arith.mulf %7, %9 : vector<128x128xf32>
    %cst_8 = arith.constant dense<0.000000e+00> : vector<128xf32>
    %11 = vector.multi_reduction <add>, %10, %cst_8 [1] : vector<128x128xf32> to vector<128xf32>
    %c0_9 = arith.constant 0 : index
    %c0_10 = arith.constant 0 : index
    %12 = memref.load %arg5[%c0_9, %c0_10] : memref<1x1xf32, #tpu.memory_space<smem>>
    %13 = vector.broadcast %12 : f32 to vector<128xf32>
    %14 = arith.addf %11, %13 : vector<128xf32>
    %15 = vector.shape_cast %14 : vector<128xf32> to vector<1x128xf32>
    %c0_11 = arith.constant 0 : index
    %c0_12 = arith.constant 0 : index
    %16 = vector.load %arg6[%c0_11, %c0_12] : memref<1x128xf32, #tpu.memory_space<vmem>>, vector<1x128xf32>
    tpu.vector_store %arg6[%c0_11, %c0_12], %15 {strides = array<i32>} : memref<1x128xf32, #tpu.memory_space<vmem>>, vector<1x128xf32>,
    return
  }
  func.func @transform_0(%arg0: i32) -> (i32, i32) {
    %c0_i32 = arith.constant 0 : i32
    %c0_i32_0 = arith.constant 0 : i32
    return %arg0, %c0_i32 : i32, i32
  }
  func.func @transform_1(%arg0: i32) -> (i32, i32) {
    %c0_i32 = arith.constant 0 : i32
    %c0_i32_0 = arith.constant 0 : i32
    %c0_i32_1 = arith.constant 0 : i32
    return %c0_i32, %c0_i32_0 : i32, i32
  }
  func.func @transform_2(%arg0: i32) -> (i32, i32) {
    %c0_i32 = arith.constant 0 : i32
    %c0_i32_0 = arith.constant 0 : i32
    %c0_i32_1 = arith.constant 0 : i32
    return %c0_i32, %c0_i32_0 : i32, i32
  }
  func.func @transform_3(%arg0: i32) -> (i32, i32) {
    %c0_i32 = arith.constant 0 : i32
    %c0_i32_0 = arith.constant 0 : i32
    %c0_i32_1 = arith.constant 0 : i32
    return %c0_i32, %c0_i32_0 : i32, i32
  }
  func.func @transform_4(%arg0: i32) -> (i32, i32) {
    %c0_i32 = arith.constant 0 : i32
    %c0_i32_0 = arith.constant 0 : i32
    %c0_i32_1 = arith.constant 0 : i32
    return %c0_i32, %c0_i32_0 : i32, i32
  }
  func.func @transform_5(%arg0: i32) -> (i32, i32) {
    %c0_i32 = arith.constant 0 : i32
    %c0_i32_0 = arith.constant 0 : i32
    return %c0_i32, %arg0 : i32, i32
  }
}

</mosaic_0001>

<llo_original>
// kernel: ann_forward.1
$region0: #{ann_forward.1}
  #allocation0 [shape = 'u32[]', space=smem, size = 0x4, offset = 0x4, fixed_abs, tag = 'smem constant byte address 0x4 - core index']
  #allocation1 [shape = 'u32[72,128]{1,0:T(1,128)}', space=vmem, size = 0x9000, scoped, tag = 'internal scratch']
  #allocation2 [shape = 'f32[1,1]{1,0:T(1,128)S(6)}', space=smem, size = 0x200, scoped, tag = 'scoped memory for ann_forward.1']
  %s0 = inlined_call_operand.vmem [shape: f32[128,32], index: 0, kind: input, shape index: {}]
  %s1 = inlined_call_operand.vmem [shape: f32[32,128], index: 1, kind: input, shape index: {}]
  %s2 = inlined_call_operand.vmem [shape: f32[1,128], index: 2, kind: input, shape index: {}]
  %s3 = inlined_call_operand.vmem [shape: f32[1,128], index: 3, kind: input, shape index: {}]
  %s4 = inlined_call_operand.<no memory space> [shape: f32[1,1], index: 4, kind: input, shape index: {}]
  %s5 = inlined_call_operand.vmem [shape: f32[1,128], index: 5, kind: output, shape index: {}]
  %s6 = sld [smem:[#allocation0]]
  $region30: #{ann_forward.1} parent=0
    _
  %s8 = ssub.s32 1, %s6
  %s9 = scalar_select 0, %s8, %s6
  %10 = sst [smem:[#allocation2]] %s4
  // Predicated region
  $region2: #{ann_forward.1} parent=0 // pred_check
    _
  $region3: #{ann_forward.1} parent=0 // pred_check_branch
    %12 = sbr.rel (0) target = $region5
  $region4: #{ann_forward.1} parent=0 // pred_region
    _
  $region5: #{ann_forward.1} parent=0 // pred_fallthru
    _
  // Predicated region
  $region6: #{ann_forward.1} parent=0 // pred_check
    _
  $region7: #{ann_forward.1} parent=0 // pred_check_branch
    %14 = sbr.rel (0) target = $region9
  $region8: #{ann_forward.1} parent=0 // pred_region
    _
  $region9: #{ann_forward.1} parent=0 // pred_fallthru
    _
  // Predicated region
  $region10: #{ann_forward.1} parent=0 // pred_check
    _
  $region11: #{ann_forward.1} parent=0 // pred_check_branch
    %16 = sbr.rel (0) target = $region13
  $region12: #{ann_forward.1} parent=0 // pred_region
    _
  $region13: #{ann_forward.1} parent=0 // pred_fallthru
    _
  // Predicated region
  $region14: #{ann_forward.1} parent=0 // pred_check
    _
  $region15: #{ann_forward.1} parent=0 // pred_check_branch
    %18 = sbr.rel (0) target = $region17
  $region16: #{ann_forward.1} parent=0 // pred_region
    _
  $region17: #{ann_forward.1} parent=0 // pred_fallthru
    _
  // Predicated region
  $region18: #{ann_forward.1} parent=0 // pred_check
    _
  $region19: #{ann_forward.1} parent=0 // pred_check_branch
    %20 = sbr.rel (0) target = $region21
  $region20: #{ann_forward.1} parent=0 // pred_region
    _
  $region21: #{ann_forward.1} parent=0 // pred_fallthru
    _
  %v21 = vld [vmem:[%s0] sm:$0xff]
  %v22 = vld [vmem:[%s0 + $0x8] sm:$0xff]
  %v23 = vld [vmem:[%s0 + $0x10] sm:$0xff]
  %v24 = vld [vmem:[%s0 + $0x18] sm:$0xff]
  %v25 = vld [vmem:[%s0 + $0x20] sm:$0xff]
  %v26 = vld [vmem:[%s0 + $0x28] sm:$0xff]
  %v27 = vld [vmem:[%s0 + $0x30] sm:$0xff]
  %v28 = vld [vmem:[%s0 + $0x38] sm:$0xff]
  %v29 = vld [vmem:[%s0 + $0x40] sm:$0xff]
  %v30 = vld [vmem:[%s0 + $0x48] sm:$0xff]
  %v31 = vld [vmem:[%s0 + $0x50] sm:$0xff]
  %v32 = vld [vmem:[%s0 + $0x58] sm:$0xff]
  %v33 = vld [vmem:[%s0 + $0x60] sm:$0xff]
  %v34 = vld [vmem:[%s0 + $0x68] sm:$0xff]
  %v35 = vld [vmem:[%s0 + $0x70] sm:$0xff]
  %v36 = vld [vmem:[%s0 + $0x78] sm:$0xff]
  %v37 = vld [vmem:[%s1] sm:$0xff]
  %v38 = vld [vmem:[%s1 + $0x8] sm:$0xff]
  %v39 = vld [vmem:[%s1 + $0x10] sm:$0xff]
  %v40 = vld [vmem:[%s1 + $0x18] sm:$0xff]
  %v41 = vld [vmem:[%s2] sm:$0x1]
  %v43 = vperm.slane %v41, 0
  %vm45 = vcmask 261120
  %v47 = vsel %vm45, %v21, 0
  %v50 = vsel %vm45, %v22, 0
  %v53 = vsel %vm45, %v23, 0
  %v56 = vsel %vm45, %v24, 0
  %v59 = vsel %vm45, %v25, 0
  %v62 = vsel %vm45, %v26, 0
  %v65 = vsel %vm45, %v27, 0
  %v68 = vsel %vm45, %v28, 0
  %v71 = vsel %vm45, %v29, 0
  %v74 = vsel %vm45, %v30, 0
  %v77 = vsel %vm45, %v31, 0
  %v80 = vsel %vm45, %v32, 0
  %v83 = vsel %vm45, %v33, 0
  %v86 = vsel %vm45, %v34, 0
  %v89 = vsel %vm45, %v35, 0
  %v92 = vsel %vm45, %v36, 0
  %94 = vmatpush.msra.mxu0 0.0
  %95 = vmatpush.msra.mxu0 0.0
  %96 = vmatpush.msra.mxu0 0.0
  %97 = vmatpush.msra.mxu0 0.0
  %98 = vmatpush.msra.mxu0 0.0
  %99 = vmatpush.msra.mxu0 0.0
  %100 = vmatpush.msra.mxu0 0.0
  %101 = vmatpush.msra.mxu0 0.0
  %102 = vmatpush.msra.mxu0 0.0
  %103 = vmatpush.msra.mxu0 0.0
  %104 = vmatpush.msra.mxu0 0.0
  %105 = vmatpush.msra.mxu0 0.0
  %v106 = vand.u32 %v40, 4294901760
  %107 = vmatpush.msra.mxu0 %v106
  %v108 = vand.u32 %v39, 4294901760
  %109 = vmatpush.msra.mxu0 %v108
  %v110 = vand.u32 %v38, 4294901760
  %111 = vmatpush.msra.mxu0 %v110
  %v112 = vand.u32 %v37, 4294901760
  %113 = vmatpush.msra.mxu0 %v112
  %v114 = vand.u32 %v47, 4294901760
  %v115 = vsub.f32 %v47, %v114
  %v116 = vand.u32 %v115, 4294901760
  %v117 = vsub.f32 %v115, %v116
  %v118 = vand.u32 %v117, 4294901760
  %119 = vmatmul.f32.gmra.mxu0 %v118
  %v120 = vpop.f32.mrf.mxu0
  %v121 = vadd.f32 %v43, %v120
  %v122 = vand.u32 %v50, 4294901760
  %v123 = vsub.f32 %v50, %v122
  %v124 = vand.u32 %v123, 4294901760
  %v125 = vsub.f32 %v123, %v124
  %v126 = vand.u32 %v125, 4294901760
  %127 = vmatmul.f32.gmra.mxu0 %v126
  %v128 = vpop.f32.mrf.mxu0
  %v129 = vadd.f32 %v43, %v128
  %v130 = vand.u32 %v53, 4294901760
  %v131 = vsub.f32 %v53, %v130
  %v132 = vand.u32 %v131, 4294901760
  %v133 = vsub.f32 %v131, %v132
  %v134 = vand.u32 %v133, 4294901760
  %135 = vmatmul.f32.gmra.mxu0 %v134
  %v136 = vpop.f32.mrf.mxu0
  %v137 = vadd.f32 %v43, %v136
  %v138 = vand.u32 %v56, 4294901760
  %v139 = vsub.f32 %v56, %v138
  %v140 = vand.u32 %v139, 4294901760
  %v141 = vsub.f32 %v139, %v140
  %v142 = vand.u32 %v141, 4294901760
  %143 = vmatmul.f32.gmra.mxu0 %v142
  %v144 = vpop.f32.mrf.mxu0
  %v145 = vadd.f32 %v43, %v144
  %v146 = vand.u32 %v59, 4294901760
  %v147 = vsub.f32 %v59, %v146
  %v148 = vand.u32 %v147, 4294901760
  %v149 = vsub.f32 %v147, %v148
  %v150 = vand.u32 %v149, 4294901760
  %151 = vmatmul.f32.gmra.mxu0 %v150
  %v152 = vpop.f32.mrf.mxu0
  %v153 = vadd.f32 %v43, %v152
  %v154 = vand.u32 %v62, 4294901760
  %v155 = vsub.f32 %v62, %v154
  %v156 = vand.u32 %v155, 4294901760
  %v157 = vsub.f32 %v155, %v156
  %v158 = vand.u32 %v157, 4294901760
  %159 = vmatmul.f32.gmra.mxu0 %v158
  %v160 = vpop.f32.mrf.mxu0
  %v161 = vadd.f32 %v43, %v160
  %v162 = vand.u32 %v65, 4294901760
  %v163 = vsub.f32 %v65, %v162
  %v164 = vand.u32 %v163, 4294901760
  %v165 = vsub.f32 %v163, %v164
  %v166 = vand.u32 %v165, 4294901760
  %167 = vmatmul.f32.gmra.mxu0 %v166
  %v168 = vpop.f32.mrf.mxu0
  %v169 = vadd.f32 %v43, %v168
  %v170 = vand.u32 %v68, 4294901760
  %v171 = vsub.f32 %v68, %v170
  %v172 = vand.u32 %v171, 4294901760
  %v173 = vsub.f32 %v171, %v172
  %v174 = vand.u32 %v173, 4294901760
  %175 = vmatmul.f32.gmra.mxu0 %v174
  %v176 = vpop.f32.mrf.mxu0
  %v177 = vadd.f32 %v43, %v176
  %v178 = vand.u32 %v71, 4294901760
  %v179 = vsub.f32 %v71, %v178
  %v180 = vand.u32 %v179, 4294901760
  %v181 = vsub.f32 %v179, %v180
  %v182 = vand.u32 %v181, 4294901760
  %183 = vmatmul.f32.gmra.mxu0 %v182
  %v184 = vpop.f32.mrf.mxu0
  %v185 = vadd.f32 %v43, %v184
  %v186 = vand.u32 %v74, 4294901760
  %v187 = vsub.f32 %v74, %v186
  %v188 = vand.u32 %v187, 4294901760
  %v189 = vsub.f32 %v187, %v188
  %v190 = vand.u32 %v189, 4294901760
  %191 = vmatmul.f32.gmra.mxu0 %v190
  %v192 = vpop.f32.mrf.mxu0
  %v193 = vadd.f32 %v43, %v192
  %v194 = vand.u32 %v77, 4294901760
  %v195 = vsub.f32 %v77, %v194
  %v196 = vand.u32 %v195, 4294901760
  %v197 = vsub.f32 %v195, %v196
  %v198 = vand.u32 %v197, 4294901760
  %199 = vmatmul.f32.gmra.mxu0 %v198
  %v200 = vpop.f32.mrf.mxu0
  %v201 = vadd.f32 %v43, %v200
  %v202 = vand.u32 %v80, 4294901760
  %v203 = vsub.f32 %v80, %v202
  %v204 = vand.u32 %v203, 4294901760
  %v205 = vsub.f32 %v203, %v204
  %v206 = vand.u32 %v205, 4294901760
  %207 = vmatmul.f32.gmra.mxu0 %v206
  %v208 = vpop.f32.mrf.mxu0
  %v209 = vadd.f32 %v43, %v208
  %v210 = vand.u32 %v83, 4294901760
  %v211 = vsub.f32 %v83, %v210
  %v212 = vand.u32 %v211, 4294901760
  %v213 = vsub.f32 %v211, %v212
  %v214 = vand.u32 %v213, 4294901760
  %215 = vmatmul.f32.gmra.mxu0 %v214
  %v216 = vpop.f32.mrf.mxu0
  %v217 = vadd.f32 %v43, %v216
  %v218 = vand.u32 %v86, 4294901760
  %v219 = vsub.f32 %v86, %v218
  %v220 = vand.u32 %v219, 4294901760
  %v221 = vsub.f32 %v219, %v220
  %v222 = vand.u32 %v221, 4294901760
  %223 = vmatmul.f32.gmra.mxu0 %v222
  %v224 = vpop.f32.mrf.mxu0
  %v225 = vadd.f32 %v43, %v224
  %v226 = vand.u32 %v89, 4294901760
  %v227 = vsub.f32 %v89, %v226
  %v228 = vand.u32 %v227, 4294901760
  %v229 = vsub.f32 %v227, %v228
  %v230 = vand.u32 %v229, 4294901760
  %231 = vmatmul.f32.gmra.mxu0 %v230
  %v232 = vpop.f32.mrf.mxu0
  %v233 = vadd.f32 %v43, %v232
  %v234 = vand.u32 %v92, 4294901760
  %v235 = vsub.f32 %v92, %v234
  %v236 = vand.u32 %v235, 4294901760
  %v237 = vsub.f32 %v235, %v236
  %v238 = vand.u32 %v237, 4294901760
  %239 = vmatmul.f32.gmra.mxu0 %v238
  %v240 = vpop.f32.mrf.mxu0
  %v241 = vadd.f32 %v43, %v240
  %242 = vdwg.mxu0
  %243 = vmatpush.msra.mxu0 0.0
  %244 = vmatpush.msra.mxu0 0.0
  %245 = vmatpush.msra.mxu0 0.0
  %246 = vmatpush.msra.mxu0 0.0
  %247 = vmatpush.msra.mxu0 0.0
  %248 = vmatpush.msra.mxu0 0.0
  %249 = vmatpush.msra.mxu0 0.0
  %250 = vmatpush.msra.mxu0 0.0
  %251 = vmatpush.msra.mxu0 0.0
  %252 = vmatpush.msra.mxu0 0.0
  %253 = vmatpush.msra.mxu0 0.0
  %254 = vmatpush.msra.mxu0 0.0
  %v255 = vand.u32 %v40, 4294901760
  %v256 = vsub.f32 %v40, %v255
  %v257 = vand.u32 %v256, 4294901760
  %v258 = vsub.f32 %v256, %v257
  %v259 = vand.u32 %v258, 4294901760
  %260 = vmatpush.msra.mxu0 %v259
  %v261 = vand.u32 %v39, 4294901760
  %v262 = vsub.f32 %v39, %v261
  %v263 = vand.u32 %v262, 4294901760
  %v264 = vsub.f32 %v262, %v263
  %v265 = vand.u32 %v264, 4294901760
  %266 = vmatpush.msra.mxu0 %v265
  %v267 = vand.u32 %v38, 4294901760
  %v268 = vsub.f32 %v38, %v267
  %v269 = vand.u32 %v268, 4294901760
  %v270 = vsub.f32 %v268, %v269
  %v271 = vand.u32 %v270, 4294901760
  %272 = vmatpush.msra.mxu0 %v271
  %v273 = vand.u32 %v37, 4294901760
  %v274 = vsub.f32 %v37, %v273
  %v275 = vand.u32 %v274, 4294901760
  %v276 = vsub.f32 %v274, %v275
  %v277 = vand.u32 %v276, 4294901760
  %278 = vmatpush.msra.mxu0 %v277
  %v279 = vand.u32 %v47, 4294901760
  %280 = vmatmul.f32.gmra.mxu0 %v279
  %v281 = vpop.f32.mrf.mxu0
  %v282 = vadd.f32 %v121, %v281
  %v283 = vand.u32 %v50, 4294901760
  %284 = vmatmul.f32.gmra.mxu0 %v283
  %v285 = vpop.f32.mrf.mxu0
  %v286 = vadd.f32 %v129, %v285
  %v287 = vand.u32 %v53, 4294901760
  %288 = vmatmul.f32.gmra.mxu0 %v287
  %v289 = vpop.f32.mrf.mxu0
  %v290 = vadd.f32 %v137, %v289
  %v291 = vand.u32 %v56, 4294901760
  %292 = vmatmul.f32.gmra.mxu0 %v291
  %v293 = vpop.f32.mrf.mxu0
  %v294 = vadd.f32 %v145, %v293
  %v295 = vand.u32 %v59, 4294901760
  %296 = vmatmul.f32.gmra.mxu0 %v295
  %v297 = vpop.f32.mrf.mxu0
  %v298 = vadd.f32 %v153, %v297
  %v299 = vand.u32 %v62, 4294901760
  %300 = vmatmul.f32.gmra.mxu0 %v299
  %v301 = vpop.f32.mrf.mxu0
  %v302 = vadd.f32 %v161, %v301
  %v303 = vand.u32 %v65, 4294901760
  %304 = vmatmul.f32.gmra.mxu0 %v303
  %v305 = vpop.f32.mrf.mxu0
  %v306 = vadd.f32 %v169, %v305
  %v307 = vand.u32 %v68, 4294901760
  %308 = vmatmul.f32.gmra.mxu0 %v307
  %v309 = vpop.f32.mrf.mxu0
  %v310 = vadd.f32 %v177, %v309
  %v311 = vand.u32 %v71, 4294901760
  %312 = vmatmul.f32.gmra.mxu0 %v311
  %v313 = vpop.f32.mrf.mxu0
  %v314 = vadd.f32 %v185, %v313
  %v315 = vand.u32 %v74, 4294901760
  %316 = vmatmul.f32.gmra.mxu0 %v315
  %v317 = vpop.f32.mrf.mxu0
  %v318 = vadd.f32 %v193, %v317
  %v319 = vand.u32 %v77, 4294901760
  %320 = vmatmul.f32.gmra.mxu0 %v319
  %v321 = vpop.f32.mrf.mxu0
  %v322 = vadd.f32 %v201, %v321
  %v323 = vand.u32 %v80, 4294901760
  %324 = vmatmul.f32.gmra.mxu0 %v323
  %v325 = vpop.f32.mrf.mxu0
  %v326 = vadd.f32 %v209, %v325
  %v327 = vand.u32 %v83, 4294901760
  %328 = vmatmul.f32.gmra.mxu0 %v327
  %v329 = vpop.f32.mrf.mxu0
  %v330 = vadd.f32 %v217, %v329
  %v331 = vand.u32 %v86, 4294901760
  %332 = vmatmul.f32.gmra.mxu0 %v331
  %v333 = vpop.f32.mrf.mxu0
  %v334 = vadd.f32 %v225, %v333
  %v335 = vand.u32 %v89, 4294901760
  %336 = vmatmul.f32.gmra.mxu0 %v335
  %v337 = vpop.f32.mrf.mxu0
  %v338 = vadd.f32 %v233, %v337
  %v339 = vand.u32 %v92, 4294901760
  %340 = vmatmul.f32.gmra.mxu0 %v339
  %v341 = vpop.f32.mrf.mxu0
  %v342 = vadd.f32 %v241, %v341
  %343 = vdwg.mxu0
  %344 = vmatpush.msra.mxu0 0.0
  %345 = vmatpush.msra.mxu0 0.0
  %346 = vmatpush.msra.mxu0 0.0
  %347 = vmatpush.msra.mxu0 0.0
  %348 = vmatpush.msra.mxu0 0.0
  %349 = vmatpush.msra.mxu0 0.0
  %350 = vmatpush.msra.mxu0 0.0
  %351 = vmatpush.msra.mxu0 0.0
  %352 = vmatpush.msra.mxu0 0.0
  %353 = vmatpush.msra.mxu0 0.0
  %354 = vmatpush.msra.mxu0 0.0
  %355 = vmatpush.msra.mxu0 0.0
  %v356 = vand.u32 %v40, 4294901760
  %v357 = vsub.f32 %v40, %v356
  %358 = vmatpush.msra.mxu0 %v357
  %v359 = vand.u32 %v39, 4294901760
  %v360 = vsub.f32 %v39, %v359
  %361 = vmatpush.msra.mxu0 %v360
  %v362 = vand.u32 %v38, 4294901760
  %v363 = vsub.f32 %v38, %v362
  %364 = vmatpush.msra.mxu0 %v363
  %v365 = vand.u32 %v37, 4294901760
  %v366 = vsub.f32 %v37, %v365
  %367 = vmatpush.msra.mxu0 %v366
  %v368 = vand.u32 %v47, 4294901760
  %v369 = vsub.f32 %v47, %v368
  %370 = vmatmul.f32.gmra.mxu0 %v369
  %v371 = vpop.f32.mrf.mxu0
  %v372 = vadd.f32 %v282, %v371
  %v373 = vand.u32 %v50, 4294901760
  %v374 = vsub.f32 %v50, %v373
  %375 = vmatmul.f32.gmra.mxu0 %v374
  %v376 = vpop.f32.mrf.mxu0
  %v377 = vadd.f32 %v286, %v376
  %v378 = vand.u32 %v53, 4294901760
  %v379 = vsub.f32 %v53, %v378
  %380 = vmatmul.f32.gmra.mxu0 %v379
  %v381 = vpop.f32.mrf.mxu0
  %v382 = vadd.f32 %v290, %v381
  %v383 = vand.u32 %v56, 4294901760
  %v384 = vsub.f32 %v56, %v383
  %385 = vmatmul.f32.gmra.mxu0 %v384
  %v386 = vpop.f32.mrf.mxu0
  %v387 = vadd.f32 %v294, %v386
  %v388 = vand.u32 %v59, 4294901760
  %v389 = vsub.f32 %v59, %v388
  %390 = vmatmul.f32.gmra.mxu0 %v389
  %v391 = vpop.f32.mrf.mxu0
  %v392 = vadd.f32 %v298, %v391
  %v393 = vand.u32 %v62, 4294901760
  %v394 = vsub.f32 %v62, %v393
  %395 = vmatmul.f32.gmra.mxu0 %v394
  %v396 = vpop.f32.mrf.mxu0
  %v397 = vadd.f32 %v302, %v396
  %v398 = vand.u32 %v65, 4294901760
  %v399 = vsub.f32 %v65, %v398
  %400 = vmatmul.f32.gmra.mxu0 %v399
  %v401 = vpop.f32.mrf.mxu0
  %v402 = vadd.f32 %v306, %v401
  %v403 = vand.u32 %v68, 4294901760
  %v404 = vsub.f32 %v68, %v403
  %405 = vmatmul.f32.gmra.mxu0 %v404
  %v406 = vpop.f32.mrf.mxu0
  %v407 = vadd.f32 %v310, %v406
  %v408 = vand.u32 %v71, 4294901760
  %v409 = vsub.f32 %v71, %v408
  %410 = vmatmul.f32.gmra.mxu0 %v409
  %v411 = vpop.f32.mrf.mxu0
  %v412 = vadd.f32 %v314, %v411
  %v413 = vand.u32 %v74, 4294901760
  %v414 = vsub.f32 %v74, %v413
  %415 = vmatmul.f32.gmra.mxu0 %v414
  %v416 = vpop.f32.mrf.mxu0
  %v417 = vadd.f32 %v318, %v416
  %v418 = vand.u32 %v77, 4294901760
  %v419 = vsub.f32 %v77, %v418
  %420 = vmatmul.f32.gmra.mxu0 %v419
  %v421 = vpop.f32.mrf.mxu0
  %v422 = vadd.f32 %v322, %v421
  %v423 = vand.u32 %v80, 4294901760
  %v424 = vsub.f32 %v80, %v423
  %425 = vmatmul.f32.gmra.mxu0 %v424
  %v426 = vpop.f32.mrf.mxu0
  %v427 = vadd.f32 %v326, %v426
  %v428 = vand.u32 %v83, 4294901760
  %v429 = vsub.f32 %v83, %v428
  %430 = vmatmul.f32.gmra.mxu0 %v429
  %v431 = vpop.f32.mrf.mxu0
  %v432 = vadd.f32 %v330, %v431
  %v433 = vand.u32 %v86, 4294901760
  %v434 = vsub.f32 %v86, %v433
  %435 = vmatmul.f32.gmra.mxu0 %v434
  %v436 = vpop.f32.mrf.mxu0
  %v437 = vadd.f32 %v334, %v436
  %v438 = vand.u32 %v89, 4294901760
  %v439 = vsub.f32 %v89, %v438
  %440 = vmatmul.f32.gmra.mxu0 %v439
  %v441 = vpop.f32.mrf.mxu0
  %v442 = vadd.f32 %v338, %v441
  %v443 = vand.u32 %v92, 4294901760
  %v444 = vsub.f32 %v92, %v443
  %445 = vmatmul.f32.gmra.mxu0 %v444
  %v446 = vpop.f32.mrf.mxu0
  %v447 = vadd.f32 %v342, %v446
  %448 = vdwg.mxu0
  %449 = vmatpush.msra.mxu0 0.0
  %450 = vmatpush.msra.mxu0 0.0
  %451 = vmatpush.msra.mxu0 0.0
  %452 = vmatpush.msra.mxu0 0.0
  %453 = vmatpush.msra.mxu0 0.0
  %454 = vmatpush.msra.mxu0 0.0
  %455 = vmatpush.msra.mxu0 0.0
  %456 = vmatpush.msra.mxu0 0.0
  %457 = vmatpush.msra.mxu0 0.0
  %458 = vmatpush.msra.mxu0 0.0
  %459 = vmatpush.msra.mxu0 0.0
  %460 = vmatpush.msra.mxu0 0.0
  %v461 = vand.u32 %v40, 4294901760
  %462 = vmatpush.msra.mxu0 %v461
  %v463 = vand.u32 %v39, 4294901760
  %464 = vmatpush.msra.mxu0 %v463
  %v465 = vand.u32 %v38, 4294901760
  %466 = vmatpush.msra.mxu0 %v465
  %v467 = vand.u32 %v37, 4294901760
  %468 = vmatpush.msra.mxu0 %v467
  %v469 = vand.u32 %v47, 4294901760
  %v470 = vsub.f32 %v47, %v469
  %v471 = vand.u32 %v470, 4294901760
  %472 = vmatmul.f32.gmra.mxu0 %v471
  %v473 = vpop.f32.mrf.mxu0
  %v474 = vadd.f32 %v372, %v473
  %v475 = vand.u32 %v50, 4294901760
  %v476 = vsub.f32 %v50, %v475
  %v477 = vand.u32 %v476, 4294901760
  %478 = vmatmul.f32.gmra.mxu0 %v477
  %v479 = vpop.f32.mrf.mxu0
  %v480 = vadd.f32 %v377, %v479
  %v481 = vand.u32 %v53, 4294901760
  %v482 = vsub.f32 %v53, %v481
  %v483 = vand.u32 %v482, 4294901760
  %484 = vmatmul.f32.gmra.mxu0 %v483
  %v485 = vpop.f32.mrf.mxu0
  %v486 = vadd.f32 %v382, %v485
  %v487 = vand.u32 %v56, 4294901760
  %v488 = vsub.f32 %v56, %v487
  %v489 = vand.u32 %v488, 4294901760
  %490 = vmatmul.f32.gmra.mxu0 %v489
  %v491 = vpop.f32.mrf.mxu0
  %v492 = vadd.f32 %v387, %v491
  %v493 = vand.u32 %v59, 4294901760
  %v494 = vsub.f32 %v59, %v493
  %v495 = vand.u32 %v494, 4294901760
  %496 = vmatmul.f32.gmra.mxu0 %v495
  %v497 = vpop.f32.mrf.mxu0
  %v498 = vadd.f32 %v392, %v497
  %v499 = vand.u32 %v62, 4294901760
  %v500 = vsub.f32 %v62, %v499
  %v501 = vand.u32 %v500, 4294901760
  %502 = vmatmul.f32.gmra.mxu0 %v501
  %v503 = vpop.f32.mrf.mxu0
  %v504 = vadd.f32 %v397, %v503
  %v505 = vand.u32 %v65, 4294901760
  %v506 = vsub.f32 %v65, %v505
  %v507 = vand.u32 %v506, 4294901760
  %508 = vmatmul.f32.gmra.mxu0 %v507
  %v509 = vpop.f32.mrf.mxu0
  %v510 = vadd.f32 %v402, %v509
  %v511 = vand.u32 %v68, 4294901760
  %v512 = vsub.f32 %v68, %v511
  %v513 = vand.u32 %v512, 4294901760
  %514 = vmatmul.f32.gmra.mxu0 %v513
  %v515 = vpop.f32.mrf.mxu0
  %v516 = vadd.f32 %v407, %v515
  %v517 = vand.u32 %v71, 4294901760
  %v518 = vsub.f32 %v71, %v517
  %v519 = vand.u32 %v518, 4294901760
  %520 = vmatmul.f32.gmra.mxu0 %v519
  %v521 = vpop.f32.mrf.mxu0
  %v522 = vadd.f32 %v412, %v521
  %v523 = vand.u32 %v74, 4294901760
  %v524 = vsub.f32 %v74, %v523
  %v525 = vand.u32 %v524, 4294901760
  %526 = vmatmul.f32.gmra.mxu0 %v525
  %v527 = vpop.f32.mrf.mxu0
  %v528 = vadd.f32 %v417, %v527
  %v529 = vand.u32 %v77, 4294901760
  %v530 = vsub.f32 %v77, %v529
  %v531 = vand.u32 %v530, 4294901760
  %532 = vmatmul.f32.gmra.mxu0 %v531
  %v533 = vpop.f32.mrf.mxu0
  %v534 = vadd.f32 %v422, %v533
  %v535 = vand.u32 %v80, 4294901760
  %v536 = vsub.f32 %v80, %v535
  %v537 = vand.u32 %v536, 4294901760
  %538 = vmatmul.f32.gmra.mxu0 %v537
  %v539 = vpop.f32.mrf.mxu0
  %v540 = vadd.f32 %v427, %v539
  %v541 = vand.u32 %v83, 4294901760
  %v542 = vsub.f32 %v83, %v541
  %v543 = vand.u32 %v542, 4294901760
  %544 = vmatmul.f32.gmra.mxu0 %v543
  %v545 = vpop.f32.mrf.mxu0
  %v546 = vadd.f32 %v432, %v545
  %v547 = vand.u32 %v86, 4294901760
  %v548 = vsub.f32 %v86, %v547
  %v549 = vand.u32 %v548, 4294901760
  %550 = vmatmul.f32.gmra.mxu0 %v549
  %v551 = vpop.f32.mrf.mxu0
  %v552 = vadd.f32 %v437, %v551
  %v553 = vand.u32 %v89, 4294901760
  %v554 = vsub.f32 %v89, %v553
  %v555 = vand.u32 %v554, 4294901760
  %556 = vmatmul.f32.gmra.mxu0 %v555
  %v557 = vpop.f32.mrf.mxu0
  %v558 = vadd.f32 %v442, %v557
  %v559 = vand.u32 %v92, 4294901760
  %v560 = vsub.f32 %v92, %v559
  %v561 = vand.u32 %v560, 4294901760
  %562 = vmatmul.f32.gmra.mxu0 %v561
  %v563 = vpop.f32.mrf.mxu0
  %v564 = vadd.f32 %v447, %v563
  %565 = vdwg.mxu0
  %566 = vmatpush.msra.mxu0 0.0
  %567 = vmatpush.msra.mxu0 0.0
  %568 = vmatpush.msra.mxu0 0.0
  %569 = vmatpush.msra.mxu0 0.0
  %570 = vmatpush.msra.mxu0 0.0
  %571 = vmatpush.msra.mxu0 0.0
  %572 = vmatpush.msra.mxu0 0.0
  %573 = vmatpush.msra.mxu0 0.0
  %574 = vmatpush.msra.mxu0 0.0
  %575 = vmatpush.msra.mxu0 0.0
  %576 = vmatpush.msra.mxu0 0.0
  %577 = vmatpush.msra.mxu0 0.0
  %v578 = vand.u32 %v40, 4294901760
  %v579 = vsub.f32 %v40, %v578
  %v580 = vand.u32 %v579, 4294901760
  %581 = vmatpush.msra.mxu0 %v580
  %v582 = vand.u32 %v39, 4294901760
  %v583 = vsub.f32 %v39, %v582
  %v584 = vand.u32 %v583, 4294901760
  %585 = vmatpush.msra.mxu0 %v584
  %v586 = vand.u32 %v38, 4294901760
  %v587 = vsub.f32 %v38, %v586
  %v588 = vand.u32 %v587, 4294901760
  %589 = vmatpush.msra.mxu0 %v588
  %v590 = vand.u32 %v37, 4294901760
  %v591 = vsub.f32 %v37, %v590
  %v592 = vand.u32 %v591, 4294901760
  %593 = vmatpush.msra.mxu0 %v592
  %v594 = vand.u32 %v47, 4294901760
  %595 = vmatmul.f32.gmra.mxu0 %v594
  %v596 = vpop.f32.mrf.mxu0
  %v597 = vadd.f32 %v474, %v596
  %v598 = vand.u32 %v50, 4294901760
  %599 = vmatmul.f32.gmra.mxu0 %v598
  %v600 = vpop.f32.mrf.mxu0
  %v601 = vadd.f32 %v480, %v600
  %v602 = vand.u32 %v53, 4294901760
  %603 = vmatmul.f32.gmra.mxu0 %v602
  %v604 = vpop.f32.mrf.mxu0
  %v605 = vadd.f32 %v486, %v604
  %v606 = vand.u32 %v56, 4294901760
  %607 = vmatmul.f32.gmra.mxu0 %v606
  %v608 = vpop.f32.mrf.mxu0
  %v609 = vadd.f32 %v492, %v608
  %v610 = vand.u32 %v59, 4294901760
  %611 = vmatmul.f32.gmra.mxu0 %v610
  %v612 = vpop.f32.mrf.mxu0
  %v613 = vadd.f32 %v498, %v612
  %v614 = vand.u32 %v62, 4294901760
  %615 = vmatmul.f32.gmra.mxu0 %v614
  %v616 = vpop.f32.mrf.mxu0
  %v617 = vadd.f32 %v504, %v616
  %v618 = vand.u32 %v65, 4294901760
  %619 = vmatmul.f32.gmra.mxu0 %v618
  %v620 = vpop.f32.mrf.mxu0
  %v621 = vadd.f32 %v510, %v620
  %v622 = vand.u32 %v68, 4294901760
  %623 = vmatmul.f32.gmra.mxu0 %v622
  %v624 = vpop.f32.mrf.mxu0
  %v625 = vadd.f32 %v516, %v624
  %v626 = vand.u32 %v71, 4294901760
  %627 = vmatmul.f32.gmra.mxu0 %v626
  %v628 = vpop.f32.mrf.mxu0
  %v629 = vadd.f32 %v522, %v628
  %v630 = vand.u32 %v74, 4294901760
  %631 = vmatmul.f32.gmra.mxu0 %v630
  %v632 = vpop.f32.mrf.mxu0
  %v633 = vadd.f32 %v528, %v632
  %v634 = vand.u32 %v77, 4294901760
  %635 = vmatmul.f32.gmra.mxu0 %v634
  %v636 = vpop.f32.mrf.mxu0
  %v637 = vadd.f32 %v534, %v636
  %v638 = vand.u32 %v80, 4294901760
  %639 = vmatmul.f32.gmra.mxu0 %v638
  %v640 = vpop.f32.mrf.mxu0
  %v641 = vadd.f32 %v540, %v640
  %v642 = vand.u32 %v83, 4294901760
  %643 = vmatmul.f32.gmra.mxu0 %v642
  %v644 = vpop.f32.mrf.mxu0
  %v645 = vadd.f32 %v546, %v644
  %v646 = vand.u32 %v86, 4294901760
  %647 = vmatmul.f32.gmra.mxu0 %v646
  %v648 = vpop.f32.mrf.mxu0
  %v649 = vadd.f32 %v552, %v648
  %v650 = vand.u32 %v89, 4294901760
  %651 = vmatmul.f32.gmra.mxu0 %v650
  %v652 = vpop.f32.mrf.mxu0
  %v653 = vadd.f32 %v558, %v652
  %v654 = vand.u32 %v92, 4294901760
  %655 = vmatmul.f32.gmra.mxu0 %v654
  %v656 = vpop.f32.mrf.mxu0
  %v657 = vadd.f32 %v564, %v656
  %658 = vdwg.mxu0
  %659 = vmatpush.msra.mxu0 0.0
  %660 = vmatpush.msra.mxu0 0.0
  %661 = vmatpush.msra.mxu0 0.0
  %662 = vmatpush.msra.mxu0 0.0
  %663 = vmatpush.msra.mxu0 0.0
  %664 = vmatpush.msra.mxu0 0.0
  %665 = vmatpush.msra.mxu0 0.0
  %666 = vmatpush.msra.mxu0 0.0
  %667 = vmatpush.msra.mxu0 0.0
  %668 = vmatpush.msra.mxu0 0.0
  %669 = vmatpush.msra.mxu0 0.0
  %670 = vmatpush.msra.mxu0 0.0
  %v671 = vand.u32 %v40, 4294901760
  %672 = vmatpush.msra.mxu0 %v671
  %v673 = vand.u32 %v39, 4294901760
  %674 = vmatpush.msra.mxu0 %v673
  %v675 = vand.u32 %v38, 4294901760
  %676 = vmatpush.msra.mxu0 %v675
  %v677 = vand.u32 %v37, 4294901760
  %678 = vmatpush.msra.mxu0 %v677
  %v679 = vand.u32 %v47, 4294901760
  %680 = vmatmul.f32.gmra.mxu0 %v679
  %v681 = vpop.f32.mrf.mxu0
  %v682 = vadd.f32 %v597, %v681
  %v683 = vand.u32 %v50, 4294901760
  %684 = vmatmul.f32.gmra.mxu0 %v683
  %v685 = vpop.f32.mrf.mxu0
  %v686 = vadd.f32 %v601, %v685
  %v687 = vand.u32 %v53, 4294901760
  %688 = vmatmul.f32.gmra.mxu0 %v687
  %v689 = vpop.f32.mrf.mxu0
  %v690 = vadd.f32 %v605, %v689
  %v691 = vand.u32 %v56, 4294901760
  %692 = vmatmul.f32.gmra.mxu0 %v691
  %v693 = vpop.f32.mrf.mxu0
  %v694 = vadd.f32 %v609, %v693
  %v695 = vand.u32 %v59, 4294901760
  %696 = vmatmul.f32.gmra.mxu0 %v695
  %v697 = vpop.f32.mrf.mxu0
  %v698 = vadd.f32 %v613, %v697
  %v699 = vand.u32 %v62, 4294901760
  %700 = vmatmul.f32.gmra.mxu0 %v699
  %v701 = vpop.f32.mrf.mxu0
  %v702 = vadd.f32 %v617, %v701
  %v703 = vand.u32 %v65, 4294901760
  %704 = vmatmul.f32.gmra.mxu0 %v703
  %v705 = vpop.f32.mrf.mxu0
  %v706 = vadd.f32 %v621, %v705
  %v707 = vand.u32 %v68, 4294901760
  %708 = vmatmul.f32.gmra.mxu0 %v707
  %v709 = vpop.f32.mrf.mxu0
  %v710 = vadd.f32 %v625, %v709
  %v711 = vand.u32 %v71, 4294901760
  %712 = vmatmul.f32.gmra.mxu0 %v711
  %v713 = vpop.f32.mrf.mxu0
  %v714 = vadd.f32 %v629, %v713
  %v715 = vand.u32 %v74, 4294901760
  %716 = vmatmul.f32.gmra.mxu0 %v715
  %v717 = vpop.f32.mrf.mxu0
  %v718 = vadd.f32 %v633, %v717
  %v719 = vand.u32 %v77, 4294901760
  %720 = vmatmul.f32.gmra.mxu0 %v719
  %v721 = vpop.f32.mrf.mxu0
  %v722 = vadd.f32 %v637, %v721
  %v723 = vand.u32 %v80, 4294901760
  %724 = vmatmul.f32.gmra.mxu0 %v723
  %v725 = vpop.f32.mrf.mxu0
  %v726 = vadd.f32 %v641, %v725
  %v727 = vand.u32 %v83, 4294901760
  %728 = vmatmul.f32.gmra.mxu0 %v727
  %v729 = vpop.f32.mrf.mxu0
  %v730 = vadd.f32 %v645, %v729
  %v731 = vand.u32 %v86, 4294901760
  %732 = vmatmul.f32.gmra.mxu0 %v731
  %v733 = vpop.f32.mrf.mxu0
  %v734 = vadd.f32 %v649, %v733
  %v735 = vand.u32 %v89, 4294901760
  %736 = vmatmul.f32.gmra.mxu0 %v735
  %v737 = vpop.f32.mrf.mxu0
  %v738 = vadd.f32 %v653, %v737
  %v739 = vand.u32 %v92, 4294901760
  %740 = vmatmul.f32.gmra.mxu0 %v739
  %v741 = vpop.f32.mrf.mxu0
  %v742 = vadd.f32 %v657, %v741
  %743 = vdwg.mxu0
  %v744 = vmax.f32 %v682, 0.0
  %v745 = vmax.f32 %v686, 0.0
  %v746 = vmax.f32 %v690, 0.0
  %v747 = vmax.f32 %v694, 0.0
  %v748 = vmax.f32 %v698, 0.0
  %v749 = vmax.f32 %v702, 0.0
  %v750 = vmax.f32 %v706, 0.0
  %v751 = vmax.f32 %v710, 0.0
  %v752 = vmax.f32 %v714, 0.0
  %v753 = vmax.f32 %v718, 0.0
  %v754 = vmax.f32 %v722, 0.0
  %v755 = vmax.f32 %v726, 0.0
  %v756 = vmax.f32 %v730, 0.0
  %v757 = vmax.f32 %v734, 0.0
  %v758 = vmax.f32 %v738, 0.0
  %v759 = vmax.f32 %v742, 0.0
  %v760 = vld [vmem:[%s3] sm:$0x1]
  %v762 = vperm.slane %v760, 0
  %v764 = vmul.f32 %v744, %v762
  %v765 = vmul.f32 %v745, %v762
  %v766 = vmul.f32 %v746, %v762
  %v767 = vmul.f32 %v747, %v762
  %v768 = vmul.f32 %v748, %v762
  %v769 = vmul.f32 %v749, %v762
  %v770 = vmul.f32 %v750, %v762
  %v771 = vmul.f32 %v751, %v762
  %v772 = vmul.f32 %v752, %v762
  %v773 = vmul.f32 %v753, %v762
  %v774 = vmul.f32 %v754, %v762
  %v775 = vmul.f32 %v755, %v762
  %v776 = vmul.f32 %v756, %v762
  %v777 = vmul.f32 %v757, %v762
  %v778 = vmul.f32 %v758, %v762
  %v779 = vmul.f32 %v759, %v762
  %780 = vadd.xlane.f32.xlu0 %v764
  %v781 = vpop.xlane.xlu0 %780
  %782 = vadd.xlane.f32.xlu0 %v765
  %v783 = vpop.xlane.xlu0 %782
  %784 = vadd.xlane.f32.xlu0 %v766
  %v785 = vpop.xlane.xlu0 %784
  %786 = vadd.xlane.f32.xlu0 %v767
  %v787 = vpop.xlane.xlu0 %786
  %788 = vadd.xlane.f32.xlu0 %v768
  %v789 = vpop.xlane.xlu0 %788
  %790 = vadd.xlane.f32.xlu0 %v769
  %v791 = vpop.xlane.xlu0 %790
  %792 = vadd.xlane.f32.xlu0 %v770
  %v793 = vpop.xlane.xlu0 %792
  %794 = vadd.xlane.f32.xlu0 %v771
  %v795 = vpop.xlane.xlu0 %794
  %796 = vadd.xlane.f32.xlu0 %v772
  %v797 = vpop.xlane.xlu0 %796
  %798 = vadd.xlane.f32.xlu0 %v773
  %v799 = vpop.xlane.xlu0 %798
  %800 = vadd.xlane.f32.xlu0 %v774
  %v801 = vpop.xlane.xlu0 %800
  %802 = vadd.xlane.f32.xlu0 %v775
  %v803 = vpop.xlane.xlu0 %802
  %804 = vadd.xlane.f32.xlu0 %v776
  %v805 = vpop.xlane.xlu0 %804
  %806 = vadd.xlane.f32.xlu0 %v777
  %v807 = vpop.xlane.xlu0 %806
  %808 = vadd.xlane.f32.xlu0 %v778
  %v809 = vpop.xlane.xlu0 %808
  %810 = vadd.xlane.f32.xlu0 %v779
  %v811 = vpop.xlane.xlu0 %810
  %s812 = sld [smem:[#allocation2]]
  %v813 = vstv %s812
  %v814 = vadd.f32 %v781, %v813
  %v815 = vadd.f32 %v783, %v813
  %v816 = vadd.f32 %v785, %v813
  %v817 = vadd.f32 %v787, %v813
  %v818 = vadd.f32 %v789, %v813
  %v819 = vadd.f32 %v791, %v813
  %v820 = vadd.f32 %v793, %v813
  %v821 = vadd.f32 %v795, %v813
  %v822 = vadd.f32 %v797, %v813
  %v823 = vadd.f32 %v799, %v813
  %v824 = vadd.f32 %v801, %v813
  %v825 = vadd.f32 %v803, %v813
  %v826 = vadd.f32 %v805, %v813
  %v827 = vadd.f32 %v807, %v813
  %v828 = vadd.f32 %v809, %v813
  %v829 = vadd.f32 %v811, %v813
  %v846 = vlaneseq
  %v847 = vand.u32 %v846, 127
  %v848 = vperm.slane %v814, %v847
  %v849 = vadd.s32 %v847, 4294967288
  %v850 = vperm.slane %v815, %v849
  %vm851 = vcmask 130112
  %v852 = vsel %vm851, %v850, %v848
  %v853 = vadd.s32 %v847, 4294967280
  %v854 = vperm.slane %v816, %v853
  %vm855 = vcmask 195712
  %v856 = vsel %vm855, %v854, %v852
  %v857 = vadd.s32 %v847, 4294967272
  %v858 = vperm.slane %v817, %v857
  %vm859 = vcmask 261312
  %v860 = vsel %vm859, %v858, %v856
  %v861 = vadd.s32 %v847, 4294967264
  %v862 = vperm.slane %v818, %v861
  %vm863 = vcmask 326912
  %v864 = vsel %vm863, %v862, %v860
  %v865 = vadd.s32 %v847, 4294967256
  %v866 = vperm.slane %v819, %v865
  %vm867 = vcmask 392512
  %v868 = vsel %vm867, %v866, %v864
  %v869 = vadd.s32 %v847, 4294967248
  %v870 = vperm.slane %v820, %v869
  %vm871 = vcmask 458112
  %v872 = vsel %vm871, %v870, %v868
  %v873 = vadd.s32 %v847, 4294967240
  %v874 = vperm.slane %v821, %v873
  %vm875 = vcmask 523712
  %v876 = vsel %vm875, %v874, %v872
  %v877 = vadd.s32 %v847, 4294967232
  %v878 = vperm.slane %v822, %v877
  %vm879 = vcmask 589312
  %v880 = vsel %vm879, %v878, %v876
  %v881 = vadd.s32 %v847, 4294967224
  %v882 = vperm.slane %v823, %v881
  %vm883 = vcmask 654912
  %v884 = vsel %vm883, %v882, %v880
  %v885 = vadd.s32 %v847, 4294967216
  %v886 = vperm.slane %v824, %v885
  %vm887 = vcmask 720512
  %v888 = vsel %vm887, %v886, %v884
  %v889 = vadd.s32 %v847, 4294967208
  %v890 = vperm.slane %v825, %v889
  %vm891 = vcmask 786112
  %v892 = vsel %vm891, %v890, %v888
  %v893 = vadd.s32 %v847, 4294967200
  %v894 = vperm.slane %v826, %v893
  %vm895 = vcmask 851712
  %v896 = vsel %vm895, %v894, %v892
  %v897 = vadd.s32 %v847, 4294967192
  %v898 = vperm.slane %v827, %v897
  %vm899 = vcmask 917312
  %v900 = vsel %vm899, %v898, %v896
  %v901 = vadd.s32 %v847, 4294967184
  %v902 = vperm.slane %v828, %v901
  %vm903 = vcmask 982912
  %v904 = vsel %vm903, %v902, %v900
  %v905 = vadd.s32 %v847, 4294967176
  %v906 = vperm.slane %v829, %v905
  %vm907 = vcmask 1048512
  %v908 = vsel %vm907, %v906, %v904
  %910 = vst [vmem:[%s5] sm:$0x1] %v908
  // Predicated region
  $region22: #{ann_forward.1} parent=0 // pred_check
    _
  $region23: #{ann_forward.1} parent=0 // pred_check_branch
    %912 = sbr.rel (0) target = $region25
  $region24: #{ann_forward.1} parent=0 // pred_region
    _
  $region25: #{ann_forward.1} parent=0 // pred_fallthru
    _
  // Predicated region
  $region26: #{ann_forward.1} parent=0 // pred_check
    _
  $region27: #{ann_forward.1} parent=0 // pred_check_branch
    %914 = sbr.rel (0) target = $region29
  $region28: #{ann_forward.1} parent=0 // pred_region
    _
  $region29: #{ann_forward.1} parent=0 // pred_fallthru
    _

</llo_original>
